<compile_context>
chip_gen: v7x
topology: tpu7x:2x2x1
jax: 0.10.0
libtpu: 0.0.40
codegen_flags: <defaults>
</compile_context>

<pallas_src>
import jax
import jax.numpy as jnp
from jax.experimental import pallas as pl
from jax.experimental.pallas import tpu as pltpu


def _round_up(x, m):
    return ((x + m - 1) // m) * m


def _pick_tile_rows(howo, target=512):
    """Largest multiple-of-8 divisor of howo that is <= target; fall back to full extent."""
    best = howo
    for d in range(8, min(target, howo) + 1, 8):
        if howo % d == 0:
            best = d
    return best


def transition_kernel(x_ref, scale_ref, shift_ref, w_ref, o_ref):
    # x_ref:     (1, 4, T, Cin_p) f32  -- axis 1 = 2x2 pool-window member (dh*2+dw)
    # scale_ref: (1, Cin_p)       f32  -- folded BN scale = gamma / sqrt(var + eps)
    # shift_ref: (1, Cin_p)       f32  -- folded BN shift = beta - mean * scale
    # w_ref:     (Cin_p, Cout_p)  bf16 -- 1x1 conv weight (transposed, pre-scaled by 1/4, padded)
    # o_ref:     (1, T, Cout_p)   f32
    x = x_ref[0]                                                  # (4, T, Cin_p)
    y = jnp.maximum(x * scale_ref[...] + shift_ref[...], 0.0)     # BN (eval) + ReLU, f32 VPU
    p = y[0] + y[1] + y[2] + y[3]                                 # 2x2 pool sum (1/4 is in w)
    # 1x1 conv on pooled rows: bf16 operands, f32 accumulation on the MXU.
    o_ref[0] = jnp.dot(p.astype(jnp.bfloat16), w_ref[...],
                       preferred_element_type=jnp.float32)


def transition_forward(x_nchw, gamma, beta, run_mean, run_var, conv_w,
                       eps=1e-5, tile_rows=None):
    """Transition.forward for NCHW float32 input; BN uses running stats (eval mode)."""
    N, Cin, H, W = x_nchw.shape
    Cout = conv_w.shape[0]
    Ho, Wo = H // 2, W // 2
    HoWo = Ho * Wo

    Cin_p = _round_up(Cin, 128)
    Cout_p = _round_up(Cout, 128)

    if tile_rows is None:
        tile_rows = _pick_tile_rows(HoWo)
    assert HoWo % tile_rows == 0, (HoWo, tile_rows)
    assert tile_rows % 8 == 0 or tile_rows == HoWo, tile_rows

    # glue: NCHW -> (N, 4, Ho*Wo, Cin_p); axis 1 is the pool-window member.
    # TODO(synk): in a full NHWC end-to-end model this rearrange would be fused into the producer.
    x6 = x_nchw.astype(jnp.float32).reshape(N, Cin, Ho, 2, Wo, 2)
    xr = jnp.transpose(x6, (0, 3, 5, 2, 4, 1)).reshape(N, 4, HoWo, Cin)
    xr = jnp.pad(xr, ((0, 0), (0, 0), (0, 0), (0, Cin_p - Cin)))

    # fold BN into per-channel scale/shift (f32), padded to lane width.
    scale = (gamma / jnp.sqrt(run_var + eps)).astype(jnp.float32)
    shift = (beta - run_mean * scale).astype(jnp.float32)
    scale = jnp.pad(scale, (0, Cin_p - Cin)).reshape(1, Cin_p)
    shift = jnp.pad(shift, (0, Cin_p - Cin)).reshape(1, Cin_p)

    # 1x1 conv weight: (Cout, Cin, 1, 1) -> (Cin_p, Cout_p) bf16 (MXU operand).
    # The 2x2-avg-pool 1/4 factor is folded in here (pool is commuted across the linear conv).
    w = jnp.transpose(conv_w.reshape(Cout, Cin), (1, 0)).astype(jnp.float32) * 0.25
    w = jnp.pad(w, ((0, Cin_p - Cin), (0, Cout_p - Cout))).astype(jnp.bfloat16)

    grid = (N, HoWo // tile_rows)

    flops = (2 * N * HoWo * Cin_p * Cout_p            # 1x1 conv on pooled rows
             + N * 4 * HoWo * Cin_p * 3               # BN + ReLU
             + N * HoWo * Cin_p * 3)                  # pool adds
    bytes_accessed = (N * 4 * HoWo * Cin_p * 4        # activation in (f32)
                      + Cin_p * Cout_p * 2            # weight (bf16)
                      + 2 * Cin_p * 4                 # scale/shift
                      + N * HoWo * Cout_p * 4)        # output (f32)

    out = pl.pallas_call(
        transition_kernel,
        out_shape=jax.ShapeDtypeStruct((N, HoWo, Cout_p), jnp.float32),
        grid_spec=pltpu.PrefetchScalarGridSpec(
            num_scalar_prefetch=0,
            grid=grid,
            in_specs=[
                pl.BlockSpec((1, 4, tile_rows, Cin_p), lambda n, t: (n, 0, t, 0)),
                pl.BlockSpec((1, Cin_p), lambda n, t: (0, 0)),
                pl.BlockSpec((1, Cin_p), lambda n, t: (0, 0)),
                pl.BlockSpec((Cin_p, Cout_p), lambda n, t: (0, 0)),
            ],
            out_specs=pl.BlockSpec((1, tile_rows, Cout_p), lambda n, t: (n, t, 0)),
        ),
        compiler_params=pltpu.CompilerParams(
            dimension_semantics=("parallel", "parallel"),
            vmem_limit_bytes=32 * 1024 * 1024,
        ),
        cost_estimate=pl.CostEstimate(
            flops=int(flops), transcendentals=0, bytes_accessed=int(bytes_accessed)),
    )(xr, scale, shift, w)

    # glue: (N, Ho*Wo, Cout_p) -> NCHW (drop channel padding).
    out = out[:, :, :Cout].reshape(N, Ho, Wo, Cout)
    return jnp.transpose(out, (0, 3, 1, 2))


def reference_forward(x, gamma, beta, rm, rv, conv_w, eps=1e-5):
    """Plain-JAX reference matching PyTorch eval-mode semantics (f32 everywhere)."""
    Cout, Cin = conv_w.shape[0], conv_w.shape[1]
    xn = (x - rm[None, :, None, None]) / jnp.sqrt(rv[None, :, None, None] + eps)
    xn = xn * gamma[None, :, None, None] + beta[None, :, None, None]
    y = jnp.maximum(xn, 0.0)
    z = jnp.einsum("nchw,oc->nohw", y, conv_w.reshape(Cout, Cin))
    N, Co, H, W = z.shape
    return z.reshape(N, Co, H // 2, 2, W // 2, 2).mean(axis=(3, 5))


if __name__ == "__main__":
    N, in_planes, out_planes, S = 2, 8, 4, 16

    key = jax.random.PRNGKey(0)
    kx, kg, kb, km, kv, kw = jax.random.split(key, 6)

    x = jax.random.normal(kx, (N, in_planes, S, S), dtype=jnp.float32)
    gamma = jax.random.uniform(kg, (in_planes,), jnp.float32, 0.5, 1.5)
    beta = 0.1 * jax.random.normal(kb, (in_planes,), jnp.float32)
    run_mean = 0.1 * jax.random.normal(km, (in_planes,), jnp.float32)
    run_var = jax.random.uniform(kv, (in_planes,), jnp.float32, 0.5, 1.5)
    conv_w = 0.1 * jax.random.normal(kw, (out_planes, in_planes, 1, 1), jnp.float32)

    # tile_rows=16 -> grid (2, 4): enough steps for DMA pipelining / megacore sharding.
    out = transition_forward(x, gamma, beta, run_mean, run_var, conv_w, tile_rows=16)
    out = jax.block_until_ready(out)

    ref = reference_forward(x, gamma, beta, run_mean, run_var, conv_w)
    assert out.shape == (N, out_planes, S // 2, S // 2), out.shape
    max_err = float(jnp.max(jnp.abs(out - ref)))
    # bf16 MXU operands with f32 accumulation -> small, bounded drift vs pure-f32 reference.
    assert jnp.allclose(out, ref, rtol=2e-2, atol=1e-2), max_err

    print("KERNEL_OK")
</pallas_src>

<mosaic_0001>
module attributes {stable_mosaic.version = 11 : i64} {
  func.func @transition_kernel(%arg0: i32, %arg1: i32, %arg2: memref<1x4x16x128xf32, #tpu.memory_space<vmem>>, %arg3: memref<1x128xf32, #tpu.memory_space<vmem>>, %arg4: memref<1x128xf32, #tpu.memory_space<vmem>>, %arg5: memref<128x128xbf16, #tpu.memory_space<vmem>>, %arg6: memref<1x16x128xf32, #tpu.memory_space<vmem>>) attributes {dimension_semantics = [#tpu.dimension_semantics<parallel>, #tpu.dimension_semantics<parallel>], iteration_bounds = array<i64: 2, 4>, scalar_prefetch = 0 : i64, scratch_operands = 0 : i64, tpu.core_type = #tpu.core_type<tc>, window_params = [{transform_indices = @transform_0, window_bounds = array<i64: 1, 4, 16, 128>}, {pipeline_mode = #tpu.pipeline_mode<synchronous>, transform_indices = @transform_1, window_bounds = array<i64: 1, 128>}, {pipeline_mode = #tpu.pipeline_mode<synchronous>, transform_indices = @transform_2, window_bounds = array<i64: 1, 128>}, {pipeline_mode = #tpu.pipeline_mode<synchronous>, transform_indices = @transform_3, window_bounds = array<i64: 128, 128>}, {transform_indices = @transform_4, window_bounds = array<i64: 1, 16, 128>}]} {
    %c0 = arith.constant 0 : index
    %c0_0 = arith.constant 0 : index
    %c0_1 = arith.constant 0 : index
    %c0_2 = arith.constant 0 : index
    %0 = vector.load %arg2[%c0, %c0_0, %c0_1, %c0_2] : memref<1x4x16x128xf32, #tpu.memory_space<vmem>>, vector<1x4x16x128xf32>
    %1 = vector.shape_cast %0 : vector<1x4x16x128xf32> to vector<4x16x128xf32>
    %c0_3 = arith.constant 0 : index
    %c0_4 = arith.constant 0 : index
    %2 = vector.load %arg3[%c0_3, %c0_4] : memref<1x128xf32, #tpu.memory_space<vmem>>, vector<1x128xf32>
    %3 = vector.shape_cast %2 : vector<1x128xf32> to vector<1x1x128xf32>
    %4 = vector.broadcast %3 : vector<1x1x128xf32> to vector<4x16x128xf32>
    %5 = arith.mulf %1, %4 : vector<4x16x128xf32>
    %c0_5 = arith.constant 0 : index
    %c0_6 = arith.constant 0 : index
    %6 = vector.load %arg4[%c0_5, %c0_6] : memref<1x128xf32, #tpu.memory_space<vmem>>, vector<1x128xf32>
    %7 = vector.shape_cast %6 : vector<1x128xf32> to vector<1x1x128xf32>
    %8 = vector.broadcast %7 : vector<1x1x128xf32> to vector<4x16x128xf32>
    %9 = arith.addf %5, %8 : vector<4x16x128xf32>
    %cst = arith.constant 0.000000e+00 : f32
    %10 = vector.broadcast %cst : f32 to vector<4x16x128xf32>
    %11 = arith.maximumf %9, %10 : vector<4x16x128xf32>
    %12 = vector.extract_strided_slice %11 {offsets = [0, 0, 0], sizes = [1, 16, 128], strides = [1, 1, 1]} : vector<4x16x128xf32> to vector<1x16x128xf32>
    %13 = vector.shape_cast %12 : vector<1x16x128xf32> to vector<16x128xf32>
    %14 = vector.extract_strided_slice %11 {offsets = [1, 0, 0], sizes = [1, 16, 128], strides = [1, 1, 1]} : vector<4x16x128xf32> to vector<1x16x128xf32>
    %15 = vector.shape_cast %14 : vector<1x16x128xf32> to vector<16x128xf32>
    %16 = arith.addf %13, %15 : vector<16x128xf32>
    %17 = vector.extract_strided_slice %11 {offsets = [2, 0, 0], sizes = [1, 16, 128], strides = [1, 1, 1]} : vector<4x16x128xf32> to vector<1x16x128xf32>
    %18 = vector.shape_cast %17 : vector<1x16x128xf32> to vector<16x128xf32>
    %19 = arith.addf %16, %18 : vector<16x128xf32>
    %20 = vector.extract_strided_slice %11 {offsets = [3, 0, 0], sizes = [1, 16, 128], strides = [1, 1, 1]} : vector<4x16x128xf32> to vector<1x16x128xf32>
    %21 = vector.shape_cast %20 : vector<1x16x128xf32> to vector<16x128xf32>
    %22 = arith.addf %19, %21 : vector<16x128xf32>
    %23 = arith.truncf %22 : vector<16x128xf32> to vector<16x128xbf16>
    %c0_7 = arith.constant 0 : index
    %c0_8 = arith.constant 0 : index
    %24 = vector.load %arg5[%c0_7, %c0_8] : memref<128x128xbf16, #tpu.memory_space<vmem>>, vector<128x128xbf16>
    %cst_9 = arith.constant dense<0.000000e+00> : vector<16x128xf32>
    %25 = tpu.matmul %23, %24, %cst_9 {dimension_numbers = #tpu.dot_dimension_numbers<[1], [0], [0], [1], [0, 0, 1, 1], [], []>} : vector<16x128xbf16>, vector<128x128xbf16>, vector<16x128xf32> -> vector<16x128xf32>
    %c0_10 = arith.constant 0 : index
    %c0_11 = arith.constant 0 : index
    %c0_12 = arith.constant 0 : index
    %26 = vector.load %arg6[%c0_10, %c0_11, %c0_12] : memref<1x16x128xf32, #tpu.memory_space<vmem>>, vector<1x16x128xf32>
    %27 = vector.shape_cast %26 : vector<1x16x128xf32> to vector<16x128xf32>
    %28 = vector.shape_cast %25 : vector<16x128xf32> to vector<1x16x128xf32>
    tpu.vector_store %arg6[%c0_10, %c0_11, %c0_12], %28 {strides = array<i32>} : memref<1x16x128xf32, #tpu.memory_space<vmem>>, vector<1x16x128xf32>,
    return
  }
  func.func @transform_0(%arg0: i32, %arg1: i32) -> (i32, i32, i32, i32) {
    %c0_i32 = arith.constant 0 : i32
    %c0_i32_0 = arith.constant 0 : i32
    %c0_i32_1 = arith.constant 0 : i32
    return %arg0, %c0_i32, %arg1, %c0_i32_0 : i32, i32, i32, i32
  }
  func.func @transform_1(%arg0: i32, %arg1: i32) -> (i32, i32) {
    %c0_i32 = arith.constant 0 : i32
    %c0_i32_0 = arith.constant 0 : i32
    %c0_i32_1 = arith.constant 0 : i32
    return %c0_i32, %c0_i32_0 : i32, i32
  }
  func.func @transform_2(%arg0: i32, %arg1: i32) -> (i32, i32) {
    %c0_i32 = arith.constant 0 : i32
    %c0_i32_0 = arith.constant 0 : i32
    %c0_i32_1 = arith.constant 0 : i32
    return %c0_i32, %c0_i32_0 : i32, i32
  }
  func.func @transform_3(%arg0: i32, %arg1: i32) -> (i32, i32) {
    %c0_i32 = arith.constant 0 : i32
    %c0_i32_0 = arith.constant 0 : i32
    %c0_i32_1 = arith.constant 0 : i32
    return %c0_i32, %c0_i32_0 : i32, i32
  }
  func.func @transform_4(%arg0: i32, %arg1: i32) -> (i32, i32, i32) {
    %c0_i32 = arith.constant 0 : i32
    %c0_i32_0 = arith.constant 0 : i32
    return %arg0, %arg1, %c0_i32 : i32, i32, i32
  }
}

</mosaic_0001>

<llo_original>
// kernel: tpu_custom_call.1
$region0: #{tpu_custom_call.1}
  #allocation0 [shape = 'u32[]', space=smem, size = 0x4, offset = 0x4, fixed_abs, tag = 'smem constant byte address 0x4 - core index']
  #allocation1 [shape = 'u32[144,128]{1,0:T(1,128)}', space=vmem, size = 0x12000, scoped, tag = 'internal scratch']
  #allocation8 [shape = 's32[]', space=sflag, size = 0x4, offset = 0, fixed_abs, tag = 'sflag constant byte address 0x0 - dummy sync flag']
  %s0 = inlined_call_operand.hbm [shape: f32[2,4,64,128], index: 0, kind: input, shape index: {}]
  %s1 = inlined_call_operand.vmem [shape: f32[1,128], index: 1, kind: input, shape index: {}]
  %s2 = inlined_call_operand.vmem [shape: f32[1,128], index: 2, kind: input, shape index: {}]
  %s3 = inlined_call_operand.hbm [shape: bf16[128,128], index: 3, kind: input, shape index: {}]
  %s4 = inlined_call_operand.hbm [shape: f32[2,64,128], index: 4, kind: output, shape index: {}]
  %s5 = sld [smem:[#allocation0]]
  $region57: #{tpu_custom_call.1} parent=0
    _
  %s7 = ssub.s32 1, %s5
  %s8 = scalar_select 0, %s7, %s5
  $region1: #{tpu_custom_call.1} parent=0
    #allocation2 [shape = 'u8[65536]{0}', space=vmem, size = 0x10000, scoped, tag = 'input window, operand 0']
    #allocation3 [shape = 's32[2]{0}', space=sflag, size = 0x8, scoped, tag = 'scoped memory for tpu_custom_call.1']
    #allocation4 [shape = 's32[2]{0}', space=sflag, size = 0x8, scoped, tag = 'scoped memory for tpu_custom_call.1']
    #allocation5 [shape = 'u8[32768]{0}', space=vmem, size = 0x8000, scoped, tag = 'input window, operand 3, single buffered']
    #allocation6 [shape = 's32[1]{0}', space=sflag, size = 0x4, scoped, tag = 'scoped memory for tpu_custom_call.1']
    #allocation7 [shape = 'u8[16384]{0}', space=vmem, size = 0x4000, scoped, tag = 'output window, operand 0']
    %9 = vsyncpa [#allocation3], 0
    %s10 = scalar_lea.sflag [#allocation3], 1
    %11 = vsyncpa %s10, 0
    %12 = vsyncpa [#allocation6], 0
    %13 = vsyncpa [#allocation4], 0
    %s14 = scalar_lea.sflag [#allocation4], 1
    %15 = vsyncpa %s14, 0
    loop: start=0, step=1, limit=10
    $region2: #{tpu_custom_call.1} parent=1 // loop_pre_header
      _
    $region3: #{tpu_custom_call.1} parent=1 // loop_header
      %s17 = sphi 0, %s21
      %p18 = scmp.ge.s32.totalorder %s17, 10
      %s24 = sphi 0, %s36
      %s25 = sphi 0, %s32
      %s26 = sphi 0, %s24
      %s27 = sphi 0, %s25
      %s28 = sphi 0, %s26
      %s29 = sphi 0, %s27
      %s41 = sphi 0, %s43
      %s44 = sphi 0, %s41
      %s45 = sphi 0, %s44
      %s61 = sphi 0, %s45
      %s65 = sphi 0, %s65
      %s67 = sphi 0, %s65
      %s68 = sphi 0, %s67
      %s82 = sphi 0, %s68
      %s86 = sphi 0, %s86
      %s88 = sphi 0, %s86
      %s89 = sphi 0, %s88
      %s103 = sphi 0, %s89
      %s107 = sphi 0, %s107
      %s109 = sphi 0, %s107
      %s110 = sphi 0, %s109
      %s124 = sphi 0, %s110
      %s132 = sphi 0, %s134
      %s135 = sphi 0, %s132
      %s136 = sphi 0, %s135
      %s152 = sphi 0, %s136
    $region4: #{tpu_custom_call.1} parent=1 // loop_header_branch
      %20 = sbr.rel (%p18) target = $region8
    $region5: #{tpu_custom_call.1} parent=1 // loop_body
      %s22 = ssub.s32 %s17, 1
      %s23 = ssub.s32 %s17, 2
      %s30 = sadd.s32 1, %s25
      %p31 = scmp.ge.s32.totalorder %s30, 4
      %s32 = scalar_select %p31, 0, %s30
      %s33 = sadd.s32 1, %s24
      %s34 = scalar_select %p31, %s33, %s24
      %p35 = scmp.ge.s32.totalorder %s34, 2
      %s36 = scalar_select %p35, 0, %s34
      %s37 = ssub.s32 %s24, %s36
      %s38 = ssub.s32 %s25, %s32
      %s39 = sor.u32 %s37, %s38
      %p40 = scmp.eq.s32.totalorder %s39, 0
      %s42 = sadd.s32 %s41, 1
      %s43 = scalar_select %p40, %s41, %s42
      %p46 = pneg %p40
      %p47 = scmp.eq.s32.totalorder %s17, 7
      %p48 = por %p46, %p47
      %p49 = scmp.ne.s32.totalorder %s41, %s44
      %p50 = scmp.eq.s32.totalorder %s17, 0
      %p51 = por %p49, %p50
      %p52 = scmp.ne.s32.totalorder %s41, %s44
      %p53 = scmp.eq.s32.totalorder %s22, 7
      %p54 = por %p52, %p53
      %p55 = scmp.ne.s32.totalorder %s44, %s45
      %p56 = scmp.eq.s32.totalorder %s22, 0
      %p57 = por %p55, %p56
      %p58 = scmp.ne.s32.totalorder %s44, %s45
      %p59 = scmp.eq.s32.totalorder %s23, 7
      %p60 = por %p58, %p59
      %p62 = scmp.ne.s32.totalorder %s45, %s61
      %p63 = scmp.eq.s32.totalorder %s23, 0
      %p64 = por %p62, %p63
      %s66 = sadd.s32 %s65, 1
      %p69 = scmp.eq.s32.totalorder %s17, 7
      %p70 = scmp.ne.s32.totalorder %s65, %s67
      %p71 = scmp.eq.s32.totalorder %s17, 0
      %p72 = por %p70, %p71
      %p73 = scmp.ne.s32.totalorder %s65, %s67
      %p74 = scmp.eq.s32.totalorder %s22, 7
      %p75 = por %p73, %p74
      %p76 = scmp.ne.s32.totalorder %s67, %s68
      %p77 = scmp.eq.s32.totalorder %s22, 0
      %p78 = por %p76, %p77
      %p79 = scmp.ne.s32.totalorder %s67, %s68
      %p80 = scmp.eq.s32.totalorder %s23, 7
      %p81 = por %p79, %p80
      %p83 = scmp.ne.s32.totalorder %s68, %s82
      %p84 = scmp.eq.s32.totalorder %s23, 0
      %p85 = por %p83, %p84
      %s87 = sadd.s32 %s86, 1
      %p90 = scmp.eq.s32.totalorder %s17, 7
      %p91 = scmp.ne.s32.totalorder %s86, %s88
      %p92 = scmp.eq.s32.totalorder %s17, 0
      %p93 = por %p91, %p92
      %p94 = scmp.ne.s32.totalorder %s86, %s88
      %p95 = scmp.eq.s32.totalorder %s22, 7
      %p96 = por %p94, %p95
      %p97 = scmp.ne.s32.totalorder %s88, %s89
      %p98 = scmp.eq.s32.totalorder %s22, 0
      %p99 = por %p97, %p98
      %p100 = scmp.ne.s32.totalorder %s88, %s89
      %p101 = scmp.eq.s32.totalorder %s23, 7
      %p102 = por %p100, %p101
      %p104 = scmp.ne.s32.totalorder %s89, %s103
      %p105 = scmp.eq.s32.totalorder %s23, 0
      %p106 = por %p104, %p105
      %s108 = sadd.s32 %s107, 1
      %p111 = scmp.eq.s32.totalorder %s17, 7
      %p112 = scmp.ne.s32.totalorder %s107, %s109
      %p113 = scmp.eq.s32.totalorder %s17, 0
      %p114 = por %p112, %p113
      %p115 = scmp.ne.s32.totalorder %s107, %s109
      %p116 = scmp.eq.s32.totalorder %s22, 7
      %p117 = por %p115, %p116
      %p118 = scmp.ne.s32.totalorder %s109, %s110
      %p119 = scmp.eq.s32.totalorder %s22, 0
      %p120 = por %p118, %p119
      %p121 = scmp.ne.s32.totalorder %s109, %s110
      %p122 = scmp.eq.s32.totalorder %s23, 7
      %p123 = por %p121, %p122
      %p125 = scmp.ne.s32.totalorder %s110, %s124
      %p126 = scmp.eq.s32.totalorder %s23, 0
      %p127 = por %p125, %p126
      %s128 = ssub.s32 %s24, %s36
      %s129 = ssub.s32 %s25, %s32
      %s130 = sor.u32 %s128, %s129
      %p131 = scmp.eq.s32.totalorder %s130, 0
      %s133 = sadd.s32 %s132, 1
      %s134 = scalar_select %p131, %s132, %s133
      %p137 = pneg %p131
      %p138 = scmp.eq.s32.totalorder %s17, 7
      %p139 = por %p137, %p138
      %p140 = scmp.ne.s32.totalorder %s132, %s135
      %p141 = scmp.eq.s32.totalorder %s17, 0
      %p142 = por %p140, %p141
      %p143 = scmp.ne.s32.totalorder %s132, %s135
      %p144 = scmp.eq.s32.totalorder %s22, 7
      %p145 = por %p143, %p144
      %p146 = scmp.ne.s32.totalorder %s135, %s136
      %p147 = scmp.eq.s32.totalorder %s22, 0
      %p148 = por %p146, %p147
      %p149 = scmp.ne.s32.totalorder %s135, %s136
      %p150 = scmp.eq.s32.totalorder %s23, 7
      %p151 = por %p149, %p150
      %p153 = scmp.ne.s32.totalorder %s136, %s152
      %p154 = scmp.eq.s32.totalorder %s23, 0
      %p155 = por %p153, %p154
      %p156 = scmp.le.s32.totalorder 1, %s17
      %p157 = scmp.lt.s32.totalorder %s17, 9
      %p158 = pnand %p156, %p157
      %p159 = pneg %p158
      // Predicated region
      $region9: #{tpu_custom_call.1} parent=5 // pred_check
        _
      $region10: #{tpu_custom_call.1} parent=5 // pred_check_branch
        %161 = sbr.rel (%p158) target = $region12
      $region11: #{tpu_custom_call.1} parent=5 // pred_region
        %s162 = ssub.s32 %s17, 1
        // Predicated region
        $region13: #{tpu_custom_call.1} parent=11 // pred_check
          %p163 = pneg %p78
        $region14: #{tpu_custom_call.1} parent=11 // pred_check_branch
          %165 = sbr.rel (%p163) target = $region16
        $region15: #{tpu_custom_call.1} parent=11 // pred_region
          _
        $region16: #{tpu_custom_call.1} parent=11 // pred_fallthru
          _
        // Predicated region
        $region17: #{tpu_custom_call.1} parent=11 // pred_check
          %p166 = pneg %p99
        $region18: #{tpu_custom_call.1} parent=11 // pred_check_branch
          %168 = sbr.rel (%p166) target = $region20
        $region19: #{tpu_custom_call.1} parent=11 // pred_region
          _
        $region20: #{tpu_custom_call.1} parent=11 // pred_fallthru
          _
        // Predicated region
        $region21: #{tpu_custom_call.1} parent=11 // pred_check
          %p169 = pneg %p120
        $region22: #{tpu_custom_call.1} parent=11 // pred_check_branch
          %171 = sbr.rel (%p169) target = $region24
        $region23: #{tpu_custom_call.1} parent=11 // pred_region
          %s173 = ssub.s32 1024, 1024
          %174 = vsyncadd [#allocation6], %s173
          %s175 = sshll.u32 [#allocation5], 4
          %s176 = int_to_ptr.vmem [resolvable:$true] %s175
          %181 = dma.hbm_to_vmem [thread:$0]  %s3, 1024, %s176, [#allocation6], 64, 64, 4
        $region24: #{tpu_custom_call.1} parent=11 // pred_fallthru
          _
      $region12: #{tpu_custom_call.1} parent=5 // pred_fallthru
        _
      %p182 = scmp.lt.s32.totalorder %s17, 8
      // Predicated region
      $region25: #{tpu_custom_call.1} parent=5 // pred_check
        %p183 = pneg %p182
      $region26: #{tpu_custom_call.1} parent=5 // pred_check_branch
        %185 = sbr.rel (%p183) target = $region28
      $region27: #{tpu_custom_call.1} parent=5 // pred_region
        // Predicated region
        $region29: #{tpu_custom_call.1} parent=27 // pred_check
          %p186 = pneg %p51
        $region30: #{tpu_custom_call.1} parent=27 // pred_check_branch
          %188 = sbr.rel (%p186) target = $region32
        $region31: #{tpu_custom_call.1} parent=27 // pred_region
          #allocation9 [shape = 'u32[6]{0}', space=smem, size = 0x18, scoped, tag = 'DMA stride descriptor']
          %s189 = sand.u32 %s41, 1
          %s190 = scalar_lea.sflag [#allocation3], %s189
          %s191 = sand.u32 %s41, 1
          %s192 = smul.addr %s191, 64
          %s193 = scalar_lea.vmem [#allocation2], %s192
          %s194 = smul.u32 2, %s25
          %s196 = ssub.s32 1024, 1024
          %197 = vsyncadd %s190, %s196
          %s198 = smul.addr %s24, 32
          %s199 = sadd.s32 %s194, %s198
          %s200 = smul.addr %s199, 128
          %s201 = scalar_lea.hbm %s0, %s200
          %s203 = sshll.u32 1, 14
          %s204 = sxor.u32 4294967295, %s203
          %s206 = sld [smem:[#allocation0]]
          %s207 = sadd.s32 2, %s206
          %s209 = sshll.u32 7, 26
          %s210 = sxor.u32 4294967295, %s209
          %s211 = sand.u32 0, %s210
          %s212 = sshll.u32 %s207, 26
          %s213 = sor.u32 %s211, %s212
          %s214 = sshll.u32 %s193, 4
          %s215 = int_to_ptr.vmem [resolvable:$true] %s214
          %221 = sst [smem:[#allocation9]] 1024
          %s222 = scalar_lea.smem [#allocation9], 1
          %223 = sst [smem:[%s222]] 256
          %s224 = scalar_lea.smem [#allocation9], 2
          %225 = sst [smem:[%s224]] 2
          %s226 = scalar_lea.smem [#allocation9], 3
          %227 = sst [smem:[%s226]] 128
          %s228 = scalar_lea.smem [#allocation9], 4
          %229 = sst [smem:[%s228]] 128
          %s230 = scalar_lea.smem [#allocation9], 5
          %231 = sst [smem:[%s230]] 8
          %233 = dma.general %s201, 1024, %s215, %s190, [#allocation8], [#allocation9], %s213, 0
        $region32: #{tpu_custom_call.1} parent=27 // pred_fallthru
          _
      $region28: #{tpu_custom_call.1} parent=5 // pred_fallthru
        _
      %p234 = scmp.le.s32.totalorder 1, %s17
      %p235 = scmp.lt.s32.totalorder %s17, 9
      %p236 = pnand %p234, %p235
      %p237 = pneg %p236
      // Predicated region
      $region33: #{tpu_custom_call.1} parent=5 // pred_check
        _
      $region34: #{tpu_custom_call.1} parent=5 // pred_check_branch
        %239 = sbr.rel (%p236) target = $region36
      $region35: #{tpu_custom_call.1} parent=5 // pred_region
        %s240 = ssub.s32 %s17, 1
        %s241 = sand.u32 %s44, 1
        %s242 = scalar_lea.sflag [#allocation3], %s241
        %s243 = sand.u32 %s44, 1
        %s244 = smul.addr %s243, 64
        %s245 = scalar_lea.vmem [#allocation2], %s244
        // Predicated region
        $region37: #{tpu_custom_call.1} parent=35 // pred_check
          %p246 = pneg %p57
        $region38: #{tpu_custom_call.1} parent=35 // pred_check_branch
          %248 = sbr.rel (%p246) target = $region40
        $region39: #{tpu_custom_call.1} parent=35 // pred_region
          %249 = dma.done %s242, 1024
        $region40: #{tpu_custom_call.1} parent=35 // pred_fallthru
          _
        // Predicated region
        $region41: #{tpu_custom_call.1} parent=35 // pred_check
          %p250 = pneg %p120
        $region42: #{tpu_custom_call.1} parent=35 // pred_check_branch
          %252 = sbr.rel (%p250) target = $region44
        $region43: #{tpu_custom_call.1} parent=35 // pred_region
          %253 = dma.done [#allocation6], 1024
        $region44: #{tpu_custom_call.1} parent=35 // pred_fallthru
          _
        %s254 = sand.u32 %s44, 1
        %s255 = scalar_lea.sflag [#allocation3], %s254
        %s256 = sand.u32 %s44, 1
        %s257 = smul.addr %s256, 64
        %s258 = scalar_lea.vmem [#allocation2], %s257
        %p259 = pneg %p57
        %p260 = pneg %p54
        %p261 = pneg %p78
        %p262 = pneg %p75
        %p263 = pneg %p99
        %p264 = pneg %p96
        %p265 = pneg %p120
        %p266 = pneg %p117
        %p267 = pneg %p148
        %p268 = pneg %p145
        %s269 = sand.u32 %s135, 1
        %s270 = scalar_lea.sflag [#allocation4], %s269
        %s271 = sand.u32 %s135, 1
        %s272 = smul.addr %s271, 16
        %s273 = scalar_lea.vmem [#allocation7], %s272
        %s274 = smul.u32 2, %s27
        %s275 = smul.u32 2, %s27
        %v277 = vld [vmem:[%s245] sm:$0xff]
        %v278 = vld [vmem:[%s245 + $0x8] sm:$0xff]
        %v279 = vld [vmem:[%s245 + $0x10] sm:$0xff]
        %v280 = vld [vmem:[%s245 + $0x18] sm:$0xff]
        %v281 = vld [vmem:[%s245 + $0x20] sm:$0xff]
        %v282 = vld [vmem:[%s245 + $0x28] sm:$0xff]
        %v283 = vld [vmem:[%s245 + $0x30] sm:$0xff]
        %v284 = vld [vmem:[%s245 + $0x38] sm:$0xff]
        %v285 = vld [vmem:[%s1] sm:$0x1]
        %v287 = vlaneseq
        %v288 = vshrl.u32 %v287, 7
        %v289 = vsub.s32 0, %v288
        %v290 = vrot.slane %v285, %v289
        %v292 = vmul.f32 %v277, %v290
        %v293 = vmul.f32 %v278, %v290
        %v294 = vmul.f32 %v279, %v290
        %v295 = vmul.f32 %v280, %v290
        %v296 = vmul.f32 %v281, %v290
        %v297 = vmul.f32 %v282, %v290
        %v298 = vmul.f32 %v283, %v290
        %v299 = vmul.f32 %v284, %v290
        %v300 = vld [vmem:[%s2] sm:$0x1]
        %v302 = vlaneseq
        %v303 = vshrl.u32 %v302, 7
        %v304 = vsub.s32 0, %v303
        %v305 = vrot.slane %v300, %v304
        %v307 = vadd.f32 %v292, %v305
        %v308 = vadd.f32 %v293, %v305
        %v309 = vadd.f32 %v294, %v305
        %v310 = vadd.f32 %v295, %v305
        %v311 = vadd.f32 %v296, %v305
        %v312 = vadd.f32 %v297, %v305
        %v313 = vadd.f32 %v298, %v305
        %v314 = vadd.f32 %v299, %v305
        %v315 = vmax.f32 %v307, 0.0
        %v316 = vmax.f32 %v308, 0.0
        %v317 = vmax.f32 %v309, 0.0
        %v318 = vmax.f32 %v310, 0.0
        %v319 = vmax.f32 %v311, 0.0
        %v320 = vmax.f32 %v312, 0.0
        %v321 = vmax.f32 %v313, 0.0
        %v322 = vmax.f32 %v314, 0.0
        %v323 = vadd.f32 %v315, %v317
        %v324 = vadd.f32 %v316, %v318
        %v325 = vadd.f32 %v323, %v319
        %v326 = vadd.f32 %v324, %v320
        %v327 = vadd.f32 %v325, %v321
        %v328 = vadd.f32 %v326, %v322
        %v329 = vpack.c.bf16 %v328, %v327
        %v330 = vld [vmem:[#allocation5] sm:$0xf]
        %v331 = vld [vmem:[#allocation5 + $0x4] sm:$0xf]
        %v332 = vld [vmem:[#allocation5 + $0x8] sm:$0xf]
        %v333 = vld [vmem:[#allocation5 + $0xc] sm:$0xf]
        %v334 = vld [vmem:[#allocation5 + $0x10] sm:$0xf]
        %v335 = vld [vmem:[#allocation5 + $0x14] sm:$0xf]
        %v336 = vld [vmem:[#allocation5 + $0x18] sm:$0xf]
        %v337 = vld [vmem:[#allocation5 + $0x1c] sm:$0xf]
        %v338 = vld [vmem:[#allocation5 + $0x20] sm:$0xf]
        %v339 = vld [vmem:[#allocation5 + $0x24] sm:$0xf]
        %v340 = vld [vmem:[#allocation5 + $0x28] sm:$0xf]
        %v341 = vld [vmem:[#allocation5 + $0x2c] sm:$0xf]
        %v342 = vld [vmem:[#allocation5 + $0x30] sm:$0xf]
        %v343 = vld [vmem:[#allocation5 + $0x34] sm:$0xf]
        %v344 = vld [vmem:[#allocation5 + $0x38] sm:$0xf]
        %v345 = vld [vmem:[#allocation5 + $0x3c] sm:$0xf]
        %v362 = vunpack.c.l.b16 %v330
        %v363 = vunpack.c.l.b16 %v331
        %v364 = vunpack.c.l.b16 %v332
        %v365 = vunpack.c.l.b16 %v333
        %v366 = vunpack.c.l.b16 %v334
        %v367 = vunpack.c.l.b16 %v335
        %v368 = vunpack.c.l.b16 %v336
        %v369 = vunpack.c.l.b16 %v337
        %v370 = vunpack.c.l.b16 %v338
        %v371 = vunpack.c.l.b16 %v339
        %v372 = vunpack.c.l.b16 %v340
        %v373 = vunpack.c.l.b16 %v341
        %v374 = vunpack.c.l.b16 %v342
        %v375 = vunpack.c.l.b16 %v343
        %v376 = vunpack.c.l.b16 %v344
        %v377 = vunpack.c.l.b16 %v345
        %v378 = vpack.c.b16 %v363, %v362
        %v379 = vpack.c.b16 %v365, %v364
        %v380 = vpack.c.b16 %v367, %v366
        %v381 = vpack.c.b16 %v369, %v368
        %v382 = vpack.c.b16 %v371, %v370
        %v383 = vpack.c.b16 %v373, %v372
        %v384 = vpack.c.b16 %v375, %v374
        %v385 = vpack.c.b16 %v377, %v376
        %394 = vmatprep.subr.bf16.mxu0 0
        %395 = vmatpush1.bf16.msra.mxu0 %v378
        %396 = vmatprep.subr.bf16.mxu0 0
        %397 = vmatpush1.bf16.msra.mxu0 %v379
        %398 = vmatprep.subr.bf16.mxu0 0
        %399 = vmatpush1.bf16.msra.mxu0 %v380
        %400 = vmatprep.subr.bf16.mxu0 0
        %401 = vmatpush1.bf16.msra.mxu0 %v381
        %402 = vmatprep.subr.bf16.mxu0 0
        %403 = vmatpush1.bf16.msra.mxu0 %v382
        %404 = vmatprep.subr.bf16.mxu0 0
        %405 = vmatpush1.bf16.msra.mxu0 %v383
        %406 = vmatprep.subr.bf16.mxu0 0
        %407 = vmatpush1.bf16.msra.mxu0 %v384
        %408 = vmatprep.subr.bf16.mxu0 0
        %409 = vmatpush1.bf16.msra.mxu0 %v385
        %410 = vmatprep.subr.bf16.mxu0 0
        %411 = vmatpush1.bf16.msra.mxu0 0
        %412 = vmatprep.subr.bf16.mxu0 0
        %413 = vmatpush1.bf16.msra.mxu0 0
        %414 = vmatprep.subr.bf16.mxu0 0
        %415 = vmatpush1.bf16.msra.mxu0 0
        %416 = vmatprep.subr.bf16.mxu0 0
        %417 = vmatpush1.bf16.msra.mxu0 0
        %418 = vmatprep.subr.bf16.mxu0 0
        %419 = vmatpush1.bf16.msra.mxu0 0
        %420 = vmatprep.subr.bf16.mxu0 0
        %421 = vmatpush1.bf16.msra.mxu0 0
        %422 = vmatprep.subr.bf16.mxu0 0
        %423 = vmatpush1.bf16.msra.mxu0 0
        %424 = vmatprep.subr.bf16.mxu0 0
        %425 = vmatpush1.bf16.msra.mxu0 0
        %426 = vmatprep.mubr.bf16.mxu0 0
        %427 = vmatmul.mubr.bf16.gmra.mrb[0].mxu0 %v329
        %v428 = vpop.f32.mrb[0].mxu0
        %v429 = vadd.f32 0.0, %v428
        %v430 = vpop.f32.mrb[0].mxu0
        %v431 = vpop.f32.mrb[0].mxu0
        %v432 = vadd.f32 0.0, %v431
        %v433 = vpop.f32.mrb[0].mxu0
        %434 = vdwg.mxu0
        %435 = vst [vmem:[%s273] sm:$0xff] %v429
        %436 = vst [vmem:[%s273 + $0x8] sm:$0xff] %v432
        %s437 = sand.u32 %s135, 1
        %s438 = scalar_lea.sflag [#allocation4], %s437
        %s439 = sand.u32 %s135, 1
        %s440 = smul.addr %s439, 16
        %s441 = scalar_lea.vmem [#allocation7], %s440
        // Predicated region
        $region45: #{tpu_custom_call.1} parent=35 // pred_check
          %p442 = pneg %p145
        $region46: #{tpu_custom_call.1} parent=35 // pred_check_branch
          %444 = sbr.rel (%p442) target = $region48
        $region47: #{tpu_custom_call.1} parent=35 // pred_region
          %s445 = smul.u32 2, %s27
          %s447 = ssub.s32 256, 256
          %448 = vsyncadd %s438, %s447
          %s449 = smul.addr %s26, 8
          %s450 = sadd.s32 %s445, %s449
          %s451 = smul.addr %s450, 128
          %s452 = scalar_lea.hbm %s4, %s451
          %s453 = sshll.u32 %s441, 4
          %s454 = int_to_ptr.vmem [resolvable:$true] %s453
          %459 = dma.vmem_to_hbm [thread:$0]  %s454, 256, %s452, %s438, 128, 128, 8
        $region48: #{tpu_custom_call.1} parent=35 // pred_fallthru
          _
      $region36: #{tpu_custom_call.1} parent=5 // pred_fallthru
        _
      %p460 = scmp.le.s32.totalorder 2, %s17
      // Predicated region
      $region49: #{tpu_custom_call.1} parent=5 // pred_check
        %p461 = pneg %p460
      $region50: #{tpu_custom_call.1} parent=5 // pred_check_branch
        %463 = sbr.rel (%p461) target = $region52
      $region51: #{tpu_custom_call.1} parent=5 // pred_region
        %s464 = ssub.s32 %s17, 2
        // Predicated region
        $region53: #{tpu_custom_call.1} parent=51 // pred_check
          %p465 = pneg %p151
        $region54: #{tpu_custom_call.1} parent=51 // pred_check_branch
          %467 = sbr.rel (%p465) target = $region56
        $region55: #{tpu_custom_call.1} parent=51 // pred_region
          %s468 = sand.u32 %s136, 1
          %s469 = scalar_lea.sflag [#allocation4], %s468
          %s470 = sand.u32 %s136, 1
          %s471 = smul.addr %s470, 16
          %s472 = scalar_lea.vmem [#allocation7], %s471
          %473 = dma.done %s469, 256
        $region56: #{tpu_custom_call.1} parent=51 // pred_fallthru
          _
      $region52: #{tpu_custom_call.1} parent=5 // pred_fallthru
        _
    $region6: #{tpu_custom_call.1} parent=1 // loop_footer
      %s21 = sadd.s32 1, %s17
    $region7: #{tpu_custom_call.1} parent=1 // loop_footer_branch
      %16 = sbr.rel target = $region3
    $region8: #{tpu_custom_call.1} parent=1 // loop_exit
      _
    %474 = vsyncpa [#allocation3], 1
    %s475 = scalar_lea.sflag [#allocation3], 1
    %476 = vsyncpa %s475, 1
    %477 = vsyncpa [#allocation6], 1
    %478 = vsyncpa [#allocation4], 1
    %s479 = scalar_lea.sflag [#allocation4], 1
    %480 = vsyncpa %s479, 1

</llo_original>
